<compile_context>
chip_gen: v6e
topology: v6e:2x2x1
jax: 0.10.0
libtpu: 0.0.40
codegen_flags: <defaults>
</compile_context>

<pallas_src>
from functools import partial

import jax
import jax.numpy as jnp
from jax.experimental import pallas as pl
from jax.experimental.pallas import tpu as pltpu


def _round_up(a, b):
    return ((a + b - 1) // b) * b


def _make_kernel(input_dim, hidden, chunk):
    def kernel(x_ref, w1_ref, b1_ref, w2_ref, b2_ref, o_ref):
        # x_ref:  (input_dim, tm) compute dtype -- batch on the lane axis
        # w1_ref: (hidden, input_dim) compute dtype
        # b1_ref: (hidden, 1) compute dtype
        # w2_ref: (hidden, 1) float32
        # b2_ref: (1,) float32 in SMEM (scalar bias)
        # o_ref:  (1, tm) float32 -- lane-dense output
        if input_dim <= 8:
            # Hoist the per-feature rows once (slices are not free views).
            x_rows = [x_ref[k:k + 1, :] for k in range(input_dim)]
        else:
            x_full = x_ref[...]

        acc = None
        # Process `hidden` in sublane strips so the (hidden, tm) intermediate
        # is never materialized; each strip reduces to a (1, tm) partial.
        for c in range(0, hidden, chunk):
            cs = min(chunk, hidden - c)
            if input_dim <= 8:
                # Tiny K: broadcast mul-adds on the VPU (MXU would be ~99% idle).
                hc = w1_ref[c:c + cs, 0:1] * x_rows[0]
                for k in range(1, input_dim):
                    hc = hc + w1_ref[c:c + cs, k:k + 1] * x_rows[k]
                hc = jnp.maximum(hc + b1_ref[c:c + cs, :], 0).astype(jnp.float32)
            else:
                # TODO(synk): for large input_dim prefer bf16 operands with f32
                # accumulation and hidden padded to a multiple of 8 for the MXU.
                hc = jnp.dot(w1_ref[c:c + cs, :], x_full,
                             preferred_element_type=jnp.float32)
                hc = jnp.maximum(hc + b1_ref[c:c + cs, :].astype(jnp.float32), 0.0)
            # Layer 2 strip: elementwise mul (VPU, f32) + sublane reduce (XLU).
            part = jnp.sum(hc * w2_ref[c:c + cs, :], axis=0, keepdims=True)
            acc = part if acc is None else acc + part

        o_ref[...] = (acc + b2_ref[0]).astype(o_ref.dtype)

    return kernel


def dual_variable_forward_t(x_t, w1, b1, w2, b2, *, tm=32768,
                            compute_dtype=jnp.float32):
    """Lane-dense entry point.

    x_t: (input_dim, N)  -- batch already on the lane axis (preferred layout;
         emitting x this way upstream avoids an extra HBM re-layout pass).
    Returns (1, N) float32.
    """
    input_dim, n = x_t.shape
    hidden = w1.shape[0]

    # ---- batch-tile (lane) selection ---------------------------------------
    if n <= 128:
        tm = n                                    # single exact block (== full dim)
    else:
        tm = max(128, min((tm // 128) * 128, _round_up(n, 128)))
        if n > 256:
            # Keep >= 2 grid steps so both v7x TensorCores get work; on
            # single-TC chips this costs one ~0.35us extra step at most.
            tm = min(tm, _round_up(-(-n // 2), 128))
    grid = (pl.cdiv(n, tm),)

    cdt = jnp.dtype(compute_dtype)
    isz = cdt.itemsize
    # bf16 packs 16 sublanes per vreg; use full-vreg strips in either dtype.
    chunk = 16 if isz == 2 else 8

    x_c = x_t.astype(cdt)                                    # (input_dim, N)
    w1c = w1.astype(cdt).reshape(hidden, input_dim)          # (hidden, input_dim)
    b1c = b1.astype(cdt).reshape(hidden, 1)                  # (hidden, 1)
    w2c = w2.astype(jnp.float32).reshape(hidden, 1)          # (hidden, 1) f32
    b2s = b2.astype(jnp.float32).reshape(1)                  # (1,) scalar in SMEM

    kernel = _make_kernel(input_dim, hidden, chunk)

    # VMEM working-set estimate: x double-buffer (sublane-padded) +
    # (1, tm) f32 out double-buffer (padded to 8 sublanes) + live strip temps.
    est = tm * (2 * 8 * max(isz, 2)       # x block, 2 buffers
                + 2 * 8 * 4               # out block, 2 buffers
                + 4 * chunk * 4)          # strip temporaries (f32-equivalent)
    cp_kwargs = dict(dimension_semantics=("parallel",))
    if est > 12 * 1024 * 1024:
        # Only needed for very large tiles; v5e's default scoped limit is 16 MiB.
        cp_kwargs["vmem_limit_bytes"] = min(int(est * 1.5) + (4 << 20), 48 << 20)

    flops = 2 * n * hidden * (input_dim + 1) + 2 * n * hidden
    bytes_accessed = (x_c.size * isz + n * 4
                      + (w1c.size + b1c.size) * isz
                      + (w2c.size + b2s.size) * 4)

    out_t = pl.pallas_call(
        kernel,
        out_shape=jax.ShapeDtypeStruct((1, n), jnp.float32),
        grid_spec=pltpu.PrefetchScalarGridSpec(
            num_scalar_prefetch=0,
            grid=grid,
            in_specs=[
                pl.BlockSpec((input_dim, tm), lambda i: (0, i)),
                pl.BlockSpec((hidden, input_dim), lambda i: (0, 0)),
                pl.BlockSpec((hidden, 1), lambda i: (0, 0)),
                pl.BlockSpec((hidden, 1), lambda i: (0, 0)),
                pl.BlockSpec(memory_space=pltpu.MemorySpace.SMEM),
            ],
            out_specs=pl.BlockSpec((1, tm), lambda i: (0, i)),
        ),
        compiler_params=pltpu.CompilerParams(**cp_kwargs),
        cost_estimate=pl.CostEstimate(flops=int(flops), transcendentals=0,
                                      bytes_accessed=int(bytes_accessed)),
    )(x_c, w1c, b1c, w2c, b2s)
    return out_t


@partial(jax.jit, static_argnames=("tm", "compute_dtype"))
def dual_variable_forward(x, w1, b1, w2, b2, *, tm=32768,
                          compute_dtype=jnp.float32):
    """x: (N, input_dim). w1: (hidden, input_dim), b1: (hidden,),
    w2: (1, hidden), b2: (1,). Returns (N, 1) float32."""
    n, _ = x.shape
    # TODO(synk): ideally the producer emits x as (input_dim, N); this cast +
    # transpose is fused into the jitted program but still costs an HBM pass.
    x_t = x.T.astype(compute_dtype)
    out_t = dual_variable_forward_t(x_t, w1, b1, w2, b2, tm=tm,
                                    compute_dtype=compute_dtype)
    # (1, N) -> (N, 1): contiguity-preserving reshape, not a transpose.
    return out_t.reshape(n, 1)


def _torch_linear_init(key, out_features, in_features):
    """Deterministic replica of nn.Linear default init: U(-1/sqrt(fan_in), +)."""
    kw, kb = jax.random.split(key)
    bound = 1.0 / jnp.sqrt(jnp.float32(in_features))
    w = jax.random.uniform(kw, (out_features, in_features), jnp.float32,
                           minval=-bound, maxval=bound)
    b = jax.random.uniform(kb, (out_features,), jnp.float32,
                           minval=-bound, maxval=bound)
    return w, b


def _ref_forward(x, w1, b1, w2, b2):
    return jnp.maximum(x @ w1.T + b1, 0.0) @ w2.T + b2


if __name__ == "__main__":
    key = jax.random.PRNGKey(0)
    k_x, k_x2, k_l1, k_l2, k_l1b, k_l2b = jax.random.split(key, 6)

    input_dim, hidden_dim = 2, 32
    w1, b1 = _torch_linear_init(k_l1, hidden_dim, input_dim)   # (32, 2), (32,)
    w2, b2 = _torch_linear_init(k_l2, 1, hidden_dim)           # (1, 32), (1,)

    # 1) tiny batch -> single exact block (block dim == full dim).
    x = jax.random.normal(k_x, (8, input_dim), jnp.float32)
    out = jax.block_until_ready(dual_variable_forward(x, w1, b1, w2, b2))
    ref = _ref_forward(x, w1, b1, w2, b2)
    assert out.shape == (8, 1)
    assert jnp.allclose(out, ref, atol=1e-5, rtol=1e-5)

    # 2) ragged batch, multi-step grid (tm=128 -> 3 blocks, last one partial).
    x2 = jax.random.normal(k_x2, (300, input_dim), jnp.float32)
    out2 = jax.block_until_ready(dual_variable_forward(x2, w1, b1, w2, b2, tm=128))
    ref2 = _ref_forward(x2, w1, b1, w2, b2)
    assert out2.shape == (300, 1)
    assert jnp.allclose(out2, ref2, atol=1e-5, rtol=1e-5)

    # 3) module-default hidden=100 (exercises the strip-tail path) with the
    #    default big-tile selection (clamped + split into >=2 grid steps).
    w1b, b1b = _torch_linear_init(k_l1b, 100, input_dim)
    w2b, b2b = _torch_linear_init(k_l2b, 1, 100)
    out3 = jax.block_until_ready(dual_variable_forward(x2, w1b, b1b, w2b, b2b))
    ref3 = _ref_forward(x2, w1b, b1b, w2b, b2b)
    assert out3.shape == (300, 1)
    assert jnp.allclose(out3, ref3, atol=1e-5, rtol=1e-5)

    # 4) bf16 layer-1 compute path (v6e/v7x VALU-bound optimization); layer 2
    #    stays f32, so only a modest tolerance relaxation is needed.
    out4 = jax.block_until_ready(
        dual_variable_forward(x2, w1, b1, w2, b2, compute_dtype=jnp.bfloat16))
    assert out4.shape == (300, 1)
    assert jnp.allclose(out4, ref2, atol=5e-2, rtol=5e-2)

    print("KERNEL_OK")
</pallas_src>

<mosaic_0001>
module attributes {stable_mosaic.version = 11 : i64} {
  func.func @kernel(%arg0: i32, %arg1: memref<2x8xf32, #tpu.memory_space<vmem>>, %arg2: memref<32x2xf32, #tpu.memory_space<vmem>>, %arg3: memref<32x1xf32, #tpu.memory_space<vmem>>, %arg4: memref<32x1xf32, #tpu.memory_space<vmem>>, %arg5: memref<1xf32, #tpu.memory_space<smem>>, %arg6: memref<1x8xf32, #tpu.memory_space<vmem>>) attributes {dimension_semantics = [#tpu.dimension_semantics<parallel>], iteration_bounds = array<i64: 1>, scalar_prefetch = 0 : i64, scratch_operands = 0 : i64, tpu.core_type = #tpu.core_type<tc>, window_params = [{transform_indices = @transform_0, window_bounds = array<i64: 2, 8>}, {pipeline_mode = #tpu.pipeline_mode<synchronous>, transform_indices = @transform_1, window_bounds = array<i64: 32, 2>}, {pipeline_mode = #tpu.pipeline_mode<synchronous>, transform_indices = @transform_2, window_bounds = array<i64: 32, 1>}, {pipeline_mode = #tpu.pipeline_mode<synchronous>, transform_indices = @transform_3, window_bounds = array<i64: 32, 1>}, {transform_indices = @transform_4, window_bounds = array<i64: 1>}, {transform_indices = @transform_5, window_bounds = array<i64: 1, 8>}]} {
    %c0 = arith.constant 0 : index
    %c0_0 = arith.constant 0 : index
    %0 = vector.load %arg1[%c0, %c0_0] : memref<2x8xf32, #tpu.memory_space<vmem>>, vector<1x8xf32>
    %c1 = arith.constant 1 : index
    %c0_1 = arith.constant 0 : index
    %1 = vector.load %arg1[%c1, %c0_1] : memref<2x8xf32, #tpu.memory_space<vmem>>, vector<1x8xf32>
    %c0_2 = arith.constant 0 : index
    %c0_3 = arith.constant 0 : index
    %2 = vector.load %arg2[%c0_2, %c0_3] : memref<32x2xf32, #tpu.memory_space<vmem>>, vector<8x1xf32>
    %3 = vector.broadcast %2 : vector<8x1xf32> to vector<8x8xf32>
    %4 = vector.broadcast %0 : vector<1x8xf32> to vector<8x8xf32>
    %5 = arith.mulf %3, %4 : vector<8x8xf32>
    %c0_4 = arith.constant 0 : index
    %c1_5 = arith.constant 1 : index
    %6 = vector.load %arg2[%c0_4, %c1_5] : memref<32x2xf32, #tpu.memory_space<vmem>>, vector<8x1xf32>
    %7 = vector.broadcast %6 : vector<8x1xf32> to vector<8x8xf32>
    %8 = vector.broadcast %1 : vector<1x8xf32> to vector<8x8xf32>
    %9 = arith.mulf %7, %8 : vector<8x8xf32>
    %10 = arith.addf %5, %9 : vector<8x8xf32>
    %c0_6 = arith.constant 0 : index
    %c0_7 = arith.constant 0 : index
    %11 = vector.load %arg3[%c0_6, %c0_7] : memref<32x1xf32, #tpu.memory_space<vmem>>, vector<8x1xf32>
    %12 = vector.broadcast %11 : vector<8x1xf32> to vector<8x8xf32>
    %13 = arith.addf %10, %12 : vector<8x8xf32>
    %cst = arith.constant 0.000000e+00 : f32
    %14 = vector.broadcast %cst : f32 to vector<8x8xf32>
    %15 = arith.maximumf %13, %14 : vector<8x8xf32>
    %c0_8 = arith.constant 0 : index
    %c0_9 = arith.constant 0 : index
    %16 = vector.load %arg4[%c0_8, %c0_9] : memref<32x1xf32, #tpu.memory_space<vmem>>, vector<8x1xf32>
    %17 = vector.broadcast %16 : vector<8x1xf32> to vector<8x8xf32>
    %18 = arith.mulf %15, %17 : vector<8x8xf32>
    %cst_10 = arith.constant dense<0.000000e+00> : vector<8xf32>
    %19 = vector.multi_reduction <add>, %18, %cst_10 [0] : vector<8x8xf32> to vector<8xf32>
    %20 = vector.shape_cast %19 : vector<8xf32> to vector<1x8xf32>
    %c8 = arith.constant 8 : index
    %c0_11 = arith.constant 0 : index
    %21 = vector.load %arg2[%c8, %c0_11] : memref<32x2xf32, #tpu.memory_space<vmem>>, vector<8x1xf32>
    %22 = vector.broadcast %21 : vector<8x1xf32> to vector<8x8xf32>
    %23 = vector.broadcast %0 : vector<1x8xf32> to vector<8x8xf32>
    %24 = arith.mulf %22, %23 : vector<8x8xf32>
    %c8_12 = arith.constant 8 : index
    %c1_13 = arith.constant 1 : index
    %25 = vector.load %arg2[%c8_12, %c1_13] : memref<32x2xf32, #tpu.memory_space<vmem>>, vector<8x1xf32>
    %26 = vector.broadcast %25 : vector<8x1xf32> to vector<8x8xf32>
    %27 = vector.broadcast %1 : vector<1x8xf32> to vector<8x8xf32>
    %28 = arith.mulf %26, %27 : vector<8x8xf32>
    %29 = arith.addf %24, %28 : vector<8x8xf32>
    %c8_14 = arith.constant 8 : index
    %c0_15 = arith.constant 0 : index
    %30 = vector.load %arg3[%c8_14, %c0_15] : memref<32x1xf32, #tpu.memory_space<vmem>>, vector<8x1xf32>
    %31 = vector.broadcast %30 : vector<8x1xf32> to vector<8x8xf32>
    %32 = arith.addf %29, %31 : vector<8x8xf32>
    %cst_16 = arith.constant 0.000000e+00 : f32
    %33 = vector.broadcast %cst_16 : f32 to vector<8x8xf32>
    %34 = arith.maximumf %32, %33 : vector<8x8xf32>
    %c8_17 = arith.constant 8 : index
    %c0_18 = arith.constant 0 : index
    %35 = vector.load %arg4[%c8_17, %c0_18] : memref<32x1xf32, #tpu.memory_space<vmem>>, vector<8x1xf32>
    %36 = vector.broadcast %35 : vector<8x1xf32> to vector<8x8xf32>
    %37 = arith.mulf %34, %36 : vector<8x8xf32>
    %cst_19 = arith.constant dense<0.000000e+00> : vector<8xf32>
    %38 = vector.multi_reduction <add>, %37, %cst_19 [0] : vector<8x8xf32> to vector<8xf32>
    %39 = vector.shape_cast %38 : vector<8xf32> to vector<1x8xf32>
    %40 = arith.addf %20, %39 : vector<1x8xf32>
    %c16 = arith.constant 16 : index
    %c0_20 = arith.constant 0 : index
    %41 = vector.load %arg2[%c16, %c0_20] : memref<32x2xf32, #tpu.memory_space<vmem>>, vector<8x1xf32>
    %42 = vector.broadcast %41 : vector<8x1xf32> to vector<8x8xf32>
    %43 = vector.broadcast %0 : vector<1x8xf32> to vector<8x8xf32>
    %44 = arith.mulf %42, %43 : vector<8x8xf32>
    %c16_21 = arith.constant 16 : index
    %c1_22 = arith.constant 1 : index
    %45 = vector.load %arg2[%c16_21, %c1_22] : memref<32x2xf32, #tpu.memory_space<vmem>>, vector<8x1xf32>
    %46 = vector.broadcast %45 : vector<8x1xf32> to vector<8x8xf32>
    %47 = vector.broadcast %1 : vector<1x8xf32> to vector<8x8xf32>
    %48 = arith.mulf %46, %47 : vector<8x8xf32>
    %49 = arith.addf %44, %48 : vector<8x8xf32>
    %c16_23 = arith.constant 16 : index
    %c0_24 = arith.constant 0 : index
    %50 = vector.load %arg3[%c16_23, %c0_24] : memref<32x1xf32, #tpu.memory_space<vmem>>, vector<8x1xf32>
    %51 = vector.broadcast %50 : vector<8x1xf32> to vector<8x8xf32>
    %52 = arith.addf %49, %51 : vector<8x8xf32>
    %cst_25 = arith.constant 0.000000e+00 : f32
    %53 = vector.broadcast %cst_25 : f32 to vector<8x8xf32>
    %54 = arith.maximumf %52, %53 : vector<8x8xf32>
    %c16_26 = arith.constant 16 : index
    %c0_27 = arith.constant 0 : index
    %55 = vector.load %arg4[%c16_26, %c0_27] : memref<32x1xf32, #tpu.memory_space<vmem>>, vector<8x1xf32>
    %56 = vector.broadcast %55 : vector<8x1xf32> to vector<8x8xf32>
    %57 = arith.mulf %54, %56 : vector<8x8xf32>
    %cst_28 = arith.constant dense<0.000000e+00> : vector<8xf32>
    %58 = vector.multi_reduction <add>, %57, %cst_28 [0] : vector<8x8xf32> to vector<8xf32>
    %59 = vector.shape_cast %58 : vector<8xf32> to vector<1x8xf32>
    %60 = arith.addf %40, %59 : vector<1x8xf32>
    %c24 = arith.constant 24 : index
    %c0_29 = arith.constant 0 : index
    %61 = vector.load %arg2[%c24, %c0_29] : memref<32x2xf32, #tpu.memory_space<vmem>>, vector<8x1xf32>
    %62 = vector.broadcast %61 : vector<8x1xf32> to vector<8x8xf32>
    %63 = vector.broadcast %0 : vector<1x8xf32> to vector<8x8xf32>
    %64 = arith.mulf %62, %63 : vector<8x8xf32>
    %c24_30 = arith.constant 24 : index
    %c1_31 = arith.constant 1 : index
    %65 = vector.load %arg2[%c24_30, %c1_31] : memref<32x2xf32, #tpu.memory_space<vmem>>, vector<8x1xf32>
    %66 = vector.broadcast %65 : vector<8x1xf32> to vector<8x8xf32>
    %67 = vector.broadcast %1 : vector<1x8xf32> to vector<8x8xf32>
    %68 = arith.mulf %66, %67 : vector<8x8xf32>
    %69 = arith.addf %64, %68 : vector<8x8xf32>
    %c24_32 = arith.constant 24 : index
    %c0_33 = arith.constant 0 : index
    %70 = vector.load %arg3[%c24_32, %c0_33] : memref<32x1xf32, #tpu.memory_space<vmem>>, vector<8x1xf32>
    %71 = vector.broadcast %70 : vector<8x1xf32> to vector<8x8xf32>
    %72 = arith.addf %69, %71 : vector<8x8xf32>
    %cst_34 = arith.constant 0.000000e+00 : f32
    %73 = vector.broadcast %cst_34 : f32 to vector<8x8xf32>
    %74 = arith.maximumf %72, %73 : vector<8x8xf32>
    %c24_35 = arith.constant 24 : index
    %c0_36 = arith.constant 0 : index
    %75 = vector.load %arg4[%c24_35, %c0_36] : memref<32x1xf32, #tpu.memory_space<vmem>>, vector<8x1xf32>
    %76 = vector.broadcast %75 : vector<8x1xf32> to vector<8x8xf32>
    %77 = arith.mulf %74, %76 : vector<8x8xf32>
    %cst_37 = arith.constant dense<0.000000e+00> : vector<8xf32>
    %78 = vector.multi_reduction <add>, %77, %cst_37 [0] : vector<8x8xf32> to vector<8xf32>
    %79 = vector.shape_cast %78 : vector<8xf32> to vector<1x8xf32>
    %80 = arith.addf %60, %79 : vector<1x8xf32>
    %c0_38 = arith.constant 0 : index
    %81 = memref.load %arg5[%c0_38] : memref<1xf32, #tpu.memory_space<smem>>
    %82 = vector.broadcast %81 : f32 to vector<1x8xf32>
    %83 = arith.addf %80, %82 : vector<1x8xf32>
    %c0_39 = arith.constant 0 : index
    %c0_40 = arith.constant 0 : index
    %84 = vector.load %arg6[%c0_39, %c0_40] : memref<1x8xf32, #tpu.memory_space<vmem>>, vector<1x8xf32>
    tpu.vector_store %arg6[%c0_39, %c0_40], %83 {strides = array<i32>} : memref<1x8xf32, #tpu.memory_space<vmem>>, vector<1x8xf32>,
    return
  }
  func.func @transform_0(%arg0: i32) -> (i32, i32) {
    %c0_i32 = arith.constant 0 : i32
    %c0_i32_0 = arith.constant 0 : i32
    return %c0_i32, %arg0 : i32, i32
  }
  func.func @transform_1(%arg0: i32) -> (i32, i32) {
    %c0_i32 = arith.constant 0 : i32
    %c0_i32_0 = arith.constant 0 : i32
    %c0_i32_1 = arith.constant 0 : i32
    return %c0_i32, %c0_i32_0 : i32, i32
  }
  func.func @transform_2(%arg0: i32) -> (i32, i32) {
    %c0_i32 = arith.constant 0 : i32
    %c0_i32_0 = arith.constant 0 : i32
    %c0_i32_1 = arith.constant 0 : i32
    return %c0_i32, %c0_i32_0 : i32, i32
  }
  func.func @transform_3(%arg0: i32) -> (i32, i32) {
    %c0_i32 = arith.constant 0 : i32
    %c0_i32_0 = arith.constant 0 : i32
    %c0_i32_1 = arith.constant 0 : i32
    return %c0_i32, %c0_i32_0 : i32, i32
  }
  func.func @transform_4(%arg0: i32) -> i32 {
    %c0_i32 = arith.constant 0 : i32
    %c0_i32_0 = arith.constant 0 : i32
    return %c0_i32 : i32
  }
  func.func @transform_5(%arg0: i32) -> (i32, i32) {
    %c0_i32 = arith.constant 0 : i32
    %c0_i32_0 = arith.constant 0 : i32
    return %c0_i32, %arg0 : i32, i32
  }
}

</mosaic_0001>

<llo_original>
// kernel: dual_variable_forward.1
$region0: #{dual_variable_forward.1}
  #allocation0 [shape = 'u32[]', space=smem, size = 0x4, offset = 0x4, fixed_abs, tag = 'smem constant byte address 0x4 - core index']
  #allocation1 [shape = 'u32[144,128]{1,0:T(1,128)}', space=vmem, size = 0x12000, scoped, tag = 'internal scratch']
  #allocation2 [shape = 'f32[1]{0:T(128)S(6)}', space=smem, size = 0x200, scoped, tag = 'scoped memory for dual_variable_forward.1']
  %s0 = inlined_call_operand.vmem [shape: f32[2,8], index: 0, kind: input, shape index: {}]
  %s1 = inlined_call_operand.vmem [shape: f32[32,2], index: 1, kind: input, shape index: {}]
  %s2 = inlined_call_operand.vmem [shape: f32[32,1], index: 2, kind: input, shape index: {}]
  %s3 = inlined_call_operand.vmem [shape: f32[32,1], index: 3, kind: input, shape index: {}]
  %s4 = inlined_call_operand.<no memory space> [shape: f32[1], index: 4, kind: input, shape index: {}]
  %s5 = inlined_call_operand.hbm [shape: f32[1,8], index: 5, kind: output, shape index: {}]
  %s6 = sld [smem:[#allocation0]]
  $region30: #{dual_variable_forward.1} parent=0
    _
  %s8 = ssub.s32 1, %s6
  %s9 = scalar_select 0, %s8, %s6
  %10 = sst [smem:[#allocation2]] %s4
  $region1: #{dual_variable_forward.1} parent=0
    #allocation3 [shape = 'u8[512]{0}', space=vmem, size = 0x400, scoped, tag = 'output window, operand 0, single buffered']
    #allocation4 [shape = 's32[1]{0}', space=sflag, size = 0x4, scoped, tag = 'scoped memory for dual_variable_forward.1']
    %11 = vsyncpa [#allocation4], 0
    // Predicated region
    $region2: #{dual_variable_forward.1} parent=1 // pred_check
      _
    $region3: #{dual_variable_forward.1} parent=1 // pred_check_branch
      %13 = sbr.rel (0) target = $region5
    $region4: #{dual_variable_forward.1} parent=1 // pred_region
      _
    $region5: #{dual_variable_forward.1} parent=1 // pred_fallthru
      _
    // Predicated region
    $region6: #{dual_variable_forward.1} parent=1 // pred_check
      _
    $region7: #{dual_variable_forward.1} parent=1 // pred_check_branch
      %15 = sbr.rel (0) target = $region9
    $region8: #{dual_variable_forward.1} parent=1 // pred_region
      _
    $region9: #{dual_variable_forward.1} parent=1 // pred_fallthru
      _
    // Predicated region
    $region10: #{dual_variable_forward.1} parent=1 // pred_check
      _
    $region11: #{dual_variable_forward.1} parent=1 // pred_check_branch
      %17 = sbr.rel (0) target = $region13
    $region12: #{dual_variable_forward.1} parent=1 // pred_region
      _
    $region13: #{dual_variable_forward.1} parent=1 // pred_fallthru
      _
    // Predicated region
    $region14: #{dual_variable_forward.1} parent=1 // pred_check
      _
    $region15: #{dual_variable_forward.1} parent=1 // pred_check_branch
      %19 = sbr.rel (0) target = $region17
    $region16: #{dual_variable_forward.1} parent=1 // pred_region
      _
    $region17: #{dual_variable_forward.1} parent=1 // pred_fallthru
      _
    // Predicated region
    $region18: #{dual_variable_forward.1} parent=1 // pred_check
      _
    $region19: #{dual_variable_forward.1} parent=1 // pred_check_branch
      %21 = sbr.rel (0) target = $region21
    $region20: #{dual_variable_forward.1} parent=1 // pred_region
      _
    $region21: #{dual_variable_forward.1} parent=1 // pred_fallthru
      _
    %v22 = vld [vmem:[%s0] sm:$0x1]
    %v23 = vld [vmem:[%s0 + $0x1] sm:$0x1]
    %v24 = vld [vmem:[%s1] sm:$0xff]
    %26 = vset.pattern.permute.xlu0 0
    %27 = vperm.xlu0 %26, %v24
    %v28 = vpop.permute.xlu0 %27
    %v30 = vlaneseq
    %v31 = vshrl.u32 %v30, 7
    %v32 = vsub.s32 0, %v31
    %v33 = vrot.slane %v22, %v32
    %v34 = vmul.f32 %v28, %v33
    %35 = vset.pattern.permute.xlu0 1
    %36 = vperm.xlu0 %35, %v24
    %v37 = vpop.permute.xlu0 %36
    %v39 = vlaneseq
    %v40 = vshrl.u32 %v39, 7
    %v41 = vsub.s32 0, %v40
    %v42 = vrot.slane %v23, %v41
    %v43 = vmul.f32 %v37, %v42
    %v44 = vadd.f32 %v34, %v43
    %v45 = vld [vmem:[%s2] sm:$0xff]
    %47 = vset.pattern.permute.xlu0 0
    %48 = vperm.xlu0 %47, %v45
    %v49 = vpop.permute.xlu0 %48
    %v51 = vadd.f32 %v44, %v49
    %v52 = vmax.f32 %v51, 0.0
    %v53 = vld [vmem:[%s3] sm:$0xff]
    %55 = vset.pattern.permute.xlu0 0
    %56 = vperm.xlu0 %55, %v53
    %v57 = vpop.permute.xlu0 %56
    %v59 = vmul.f32 %v52, %v57
    %vm60 = vcmask 64512
    %v61 = vsel %vm60, %v59, 0.0
    %v62 = vrot.slane %v61, 4
    %v63 = vadd.f32 %v61, %v62
    %v64 = vrot.slane %v63, 2
    %v65 = vadd.f32 %v63, %v64
    %v66 = vrot.slane %v65, 1
    %v67 = vadd.f32 %v65, %v66
    %v68 = vld [vmem:[%s1 + $0x8] sm:$0xff]
    %70 = vset.pattern.permute.xlu0 0
    %71 = vperm.xlu0 %70, %v68
    %v72 = vpop.permute.xlu0 %71
    %v74 = vmul.f32 %v72, %v33
    %75 = vset.pattern.permute.xlu0 1
    %76 = vperm.xlu0 %75, %v68
    %v77 = vpop.permute.xlu0 %76
    %v79 = vmul.f32 %v77, %v42
    %v80 = vadd.f32 %v74, %v79
    %v81 = vld [vmem:[%s2 + $0x8] sm:$0xff]
    %83 = vset.pattern.permute.xlu0 0
    %84 = vperm.xlu0 %83, %v81
    %v85 = vpop.permute.xlu0 %84
    %v87 = vadd.f32 %v80, %v85
    %v88 = vmax.f32 %v87, 0.0
    %v89 = vld [vmem:[%s3 + $0x8] sm:$0xff]
    %91 = vset.pattern.permute.xlu0 0
    %92 = vperm.xlu0 %91, %v89
    %v93 = vpop.permute.xlu0 %92
    %v95 = vmul.f32 %v88, %v93
    %v96 = vsel %vm60, %v95, 0.0
    %v97 = vrot.slane %v96, 4
    %v98 = vadd.f32 %v96, %v97
    %v99 = vrot.slane %v98, 2
    %v100 = vadd.f32 %v98, %v99
    %v101 = vrot.slane %v100, 1
    %v102 = vadd.f32 %v100, %v101
    %v103 = vadd.f32 %v67, %v102
    %v104 = vld [vmem:[%s1 + $0x10] sm:$0xff]
    %106 = vset.pattern.permute.xlu0 0
    %107 = vperm.xlu0 %106, %v104
    %v108 = vpop.permute.xlu0 %107
    %v110 = vmul.f32 %v108, %v33
    %111 = vset.pattern.permute.xlu0 1
    %112 = vperm.xlu0 %111, %v104
    %v113 = vpop.permute.xlu0 %112
    %v115 = vmul.f32 %v113, %v42
    %v116 = vadd.f32 %v110, %v115
    %v117 = vld [vmem:[%s2 + $0x10] sm:$0xff]
    %119 = vset.pattern.permute.xlu0 0
    %120 = vperm.xlu0 %119, %v117
    %v121 = vpop.permute.xlu0 %120
    %v123 = vadd.f32 %v116, %v121
    %v124 = vmax.f32 %v123, 0.0
    %v125 = vld [vmem:[%s3 + $0x10] sm:$0xff]
    %127 = vset.pattern.permute.xlu0 0
    %128 = vperm.xlu0 %127, %v125
    %v129 = vpop.permute.xlu0 %128
    %v131 = vmul.f32 %v124, %v129
    %v132 = vsel %vm60, %v131, 0.0
    %v133 = vrot.slane %v132, 4
    %v134 = vadd.f32 %v132, %v133
    %v135 = vrot.slane %v134, 2
    %v136 = vadd.f32 %v134, %v135
    %v137 = vrot.slane %v136, 1
    %v138 = vadd.f32 %v136, %v137
    %v139 = vadd.f32 %v103, %v138
    %v140 = vld [vmem:[%s1 + $0x18] sm:$0xff]
    %142 = vset.pattern.permute.xlu0 0
    %143 = vperm.xlu0 %142, %v140
    %v144 = vpop.permute.xlu0 %143
    %v146 = vmul.f32 %v144, %v33
    %147 = vset.pattern.permute.xlu0 1
    %148 = vperm.xlu0 %147, %v140
    %v149 = vpop.permute.xlu0 %148
    %v151 = vmul.f32 %v149, %v42
    %v152 = vadd.f32 %v146, %v151
    %v153 = vld [vmem:[%s2 + $0x18] sm:$0xff]
    %155 = vset.pattern.permute.xlu0 0
    %156 = vperm.xlu0 %155, %v153
    %v157 = vpop.permute.xlu0 %156
    %v159 = vadd.f32 %v152, %v157
    %v160 = vmax.f32 %v159, 0.0
    %v161 = vld [vmem:[%s3 + $0x18] sm:$0xff]
    %163 = vset.pattern.permute.xlu0 0
    %164 = vperm.xlu0 %163, %v161
    %v165 = vpop.permute.xlu0 %164
    %v167 = vmul.f32 %v160, %v165
    %v168 = vsel %vm60, %v167, 0.0
    %v169 = vrot.slane %v168, 4
    %v170 = vadd.f32 %v168, %v169
    %v171 = vrot.slane %v170, 2
    %v172 = vadd.f32 %v170, %v171
    %v173 = vrot.slane %v172, 1
    %v174 = vadd.f32 %v172, %v173
    %v175 = vadd.f32 %v139, %v174
    %s176 = sld [smem:[#allocation2]]
    %v177 = vstv %s176
    %v178 = vadd.f32 %v175, %v177
    %vm179 = vcmask 57344
    %180 = vst.msk [vmem:[#allocation3] sm:$0x1] %vm179, %v178
    // Predicated region
    $region22: #{dual_variable_forward.1} parent=1 // pred_check
      _
    $region23: #{dual_variable_forward.1} parent=1 // pred_check_branch
      %182 = sbr.rel (0) target = $region25
    $region24: #{dual_variable_forward.1} parent=1 // pred_region
      %s184 = ssub.s32 16, 16
      %185 = vsyncadd [#allocation4], %s184
      %s187 = sshll.u32 [#allocation3], 4
      %s188 = int_to_ptr.vmem [resolvable:$true] %s187
      %190 = dma.vmem_to_hbm [thread:$0]  %s188, 16, %s5, [#allocation4]
    $region25: #{dual_variable_forward.1} parent=1 // pred_fallthru
      _
    // Predicated region
    $region26: #{dual_variable_forward.1} parent=1 // pred_check
      _
    $region27: #{dual_variable_forward.1} parent=1 // pred_check_branch
      %192 = sbr.rel (0) target = $region29
    $region28: #{dual_variable_forward.1} parent=1 // pred_region
      %193 = dma.done [#allocation4], 16
    $region29: #{dual_variable_forward.1} parent=1 // pred_fallthru
      _
    %194 = vsyncpa [#allocation4], 1

</llo_original>
